<compile_context>
chip_gen: v5e
topology: v5e:2x2
jax: 0.10.0
libtpu: 0.0.40
codegen_flags: <defaults>
</compile_context>

<pallas_src>
import numpy as np
from functools import partial

import jax
import jax.numpy as jnp
from jax.experimental import pallas as pl
from jax.experimental.pallas import tpu as pltpu

BN_EPS = 1e-5


# ----------------------------------------------------------------------------- params
def make_raw_params(key, d_in=16, d_out=8, hidden=32):
    """Torch-layout parameters (weights stored (in, out)), deterministic."""
    ks = jax.random.split(key, 10)
    noise_dim = d_out
    instat = jnp.stack([jax.random.normal(ks[0], (d_in,)) * 0.5,
                        jax.random.uniform(ks[1], (d_in,), minval=0.5, maxval=1.5)])
    outstat = jnp.stack([jax.random.normal(ks[2], (d_out,)) * 0.5,
                         jax.random.uniform(ks[3], (d_out,), minval=0.5, maxval=1.5)])
    w0 = jax.random.normal(ks[4], (d_in + noise_dim, hidden)) * 0.2
    b0 = jax.random.normal(ks[5], (hidden,)) * 0.1
    gamma = jnp.ones((hidden,), jnp.float32)          # fresh BatchNorm1d affine
    beta = jnp.zeros((hidden,), jnp.float32)
    w1 = jax.random.normal(ks[6], (hidden, hidden)) * 0.2
    b1 = jax.random.normal(ks[7], (hidden,)) * 0.1
    w2 = jax.random.normal(ks[8], (hidden, d_out)) * 0.2
    b2 = jax.random.normal(ks[9], (d_out,)) * 0.1
    return tuple(jnp.asarray(p, jnp.float32) for p in
                 (instat, w0, b0, gamma, beta, w1, b1, w2, b2, outstat))


def fold_params(raw_params):
    """Trace-time algebra: fold standardization into layer 0, mask into layer 2,
    and pack all small vectors into one (8, H) slab."""
    instat, w0, b0, gamma, beta, w1, b1, w2, b2, outstat = raw_params
    d_in = instat.shape[1]
    d_out = w2.shape[1]
    H = w1.shape[0]
    assert d_out + 1 <= H, "mask column must fit in the padded output width"

    in_mean, in_std = instat[0], instat[1]
    out_mean, out_std = outstat[0], outstat[1]

    # Layer 0: ((x - mean)/std) @ w0x + eps @ w0e + b0  ==  [x, eps] @ w0f + b0f
    w0x, w0e = w0[:d_in], w0[d_in:]
    w0f = jnp.concatenate([w0x / in_std[:, None], w0e], axis=0)
    b0f = b0 - (in_mean / in_std) @ w0x

    # Layer 2 extended with a fused mask column: raw.sum(-1) = h1 @ (w2@std) + (b2@std + sum(mean))
    w2e = (jnp.zeros((H, H), jnp.float32)
           .at[:, :d_out].set(w2)
           .at[:, d_out].set(w2 @ out_std))
    b2e = (jnp.zeros((H,), jnp.float32)
           .at[:d_out].set(b2)
           .at[d_out].set(b2 @ out_std + out_mean.sum()))

    # Small-vector slab: row0=b0f, row1=gamma, row2=beta, row3=b1, row4=b2e.
    pslab = (jnp.zeros((8, H), jnp.float32)
             .at[0].set(b0f).at[1].set(gamma).at[2].set(beta)
             .at[3].set(b1).at[4].set(b2e))
    return w0f, w1, w2e, pslab


# ----------------------------------------------------------------------------- kernel + wrapper
@partial(jax.jit, static_argnames=("b_tile",))
def masked_stochastic_resnet(x, eps, raw_params, b_tile=None):
    """Returns (output, mask) == MaskedStochasticResNet.forward(x, mask_output=False,
    return_mask=True), with eps playing the role of torch.randn noise."""
    w0f, w1, w2e, pslab = fold_params(raw_params)
    B = x.shape[0]
    d_cat = x.shape[1] + eps.shape[1]
    H = w1.shape[0]
    d_out = raw_params[7].shape[1]

    if b_tile is None:
        b_tile = B
        for t in (1024, 512, 256, 128):
            if B % t == 0 and B > t:
                b_tile = t
                break
    assert B % b_tile == 0, "batch must be a multiple of the batch tile"
    assert b_tile == B or b_tile % 8 == 0
    n_tiles = B // b_tile
    inv_n = 1.0 / float(B)  # full-batch BN normalizer (static at trace time)

    xcat = jnp.concatenate([x, eps], axis=-1)  # raw x; standardization folded into w0f

    # NOTE: bf16 matmul operands (keeping f32 accumulation) would halve VMEM/vreg
    # traffic and help v5e most, at the cost of looser agreement with the f32 torch
    # reference; kept f32 here for bit-level fidelity of the check.
    def kernel(xcat_ref, w0_ref, w1_ref, w2e_ref, ps_ref, out_ref, stats_ref):
        p = pl.program_id(0)          # 0 = BN-stats pass, 1 = forward pass
        i = pl.program_id(1)          # batch-tile index
        n_t = pl.num_programs(1)

        @pl.when(p == 0)
        def _stats_pass():
            @pl.when(i == 0)
            def _():
                stats_ref[...] = jnp.zeros_like(stats_ref)

            h0 = (jnp.dot(xcat_ref[...], w0_ref[...],
                          preferred_element_type=jnp.float32) + ps_ref[0:1, :])
            stats_ref[0:1, :] += jnp.sum(h0, axis=0, keepdims=True)
            stats_ref[1:2, :] += jnp.sum(h0 * h0, axis=0, keepdims=True)

            @pl.when(i == n_t - 1)
            def _():
                # Finalize full-batch BN into a single affine: hn = a*h0 + b
                s = stats_ref[0:1, :]
                ss = stats_ref[1:2, :]
                mu = s * inv_n
                var = ss * inv_n - mu * mu            # biased var (torch BN training mode)
                a = ps_ref[1:2, :] * jax.lax.rsqrt(var + BN_EPS)   # gamma * rstd
                stats_ref[0:1, :] = a
                stats_ref[1:2, :] = ps_ref[2:3, :] - mu * a        # beta - mu*a

        @pl.when(p == 1)
        def _forward_pass():
            h0 = (jnp.dot(xcat_ref[...], w0_ref[...],
                          preferred_element_type=jnp.float32) + ps_ref[0:1, :])
            hn = h0 * stats_ref[0:1, :] + stats_ref[1:2, :]         # BN (full-batch stats)
            ha = jnp.maximum(hn, 0.0)                               # ReLU
            h1 = (jnp.dot(ha, w1_ref[...],
                          preferred_element_type=jnp.float32) + ps_ref[3:4, :] + h0)
            # Final Linear; column d_out carries the fused mask pre-activation.
            out_ref[...] = (jnp.dot(h1, w2e_ref[...],
                                    preferred_element_type=jnp.float32) + ps_ref[4:5, :])

    # TODO(synk): marking the batch axis "parallel" would shard tiles across v7x's two
    # TensorCores but per-core scratch would break full-batch BN statistics; a
    # cross-core stats reduction (CMEM/semaphores) is needed first, so it stays serial.
    xext = pl.pallas_call(
        kernel,
        out_shape=jax.ShapeDtypeStruct((B, H), jnp.float32),
        grid_spec=pltpu.PrefetchScalarGridSpec(
            num_scalar_prefetch=0,
            grid=(2, n_tiles),
            in_specs=[
                pl.BlockSpec((b_tile, d_cat), lambda p, i: (i, 0)),  # [x, eps] tiles
                pl.BlockSpec((d_cat, H), lambda p, i: (0, 0)),       # w0 (folded), resident
                pl.BlockSpec((H, H), lambda p, i: (0, 0)),           # w1, resident
                pl.BlockSpec((H, H), lambda p, i: (0, 0)),           # w2 + mask column
                pl.BlockSpec((8, H), lambda p, i: (0, 0)),           # packed small params
            ],
            out_specs=pl.BlockSpec((b_tile, H), lambda p, i: (i, 0)),
            scratch_shapes=[pltpu.VMEM((2, H), jnp.float32)],        # BN sums -> (a, b)
        ),
        compiler_params=pltpu.CompilerParams(
            dimension_semantics=("arbitrary", "arbitrary")),
    )(xcat, w0f, w1, w2e, pslab)

    output = xext[:, :d_out]
    mask = xext[:, d_out] > 0.0
    return output, mask


# ----------------------------------------------------------------------------- reference
def reference(x, eps, raw_params):
    """Pure-JAX mirror of the PyTorch forward (returns X and raw.sum(-1))."""
    instat, w0, b0, gamma, beta, w1, b1, w2, b2, outstat = raw_params
    xs = (x - instat[0]) / instat[1]
    h = jnp.concatenate([xs, eps], axis=-1)
    h0 = h @ w0 + b0
    mu = h0.mean(0)
    var = ((h0 - mu) ** 2).mean(0)
    hn = (h0 - mu) / jnp.sqrt(var + BN_EPS) * gamma + beta
    h1 = jnp.maximum(hn, 0.0) @ w1 + b1 + h0
    X = h1 @ w2 + b2
    raw = X * outstat[1] + outstat[0]
    return X, raw.sum(-1)


# ----------------------------------------------------------------------------- demo / check
if __name__ == "__main__":
    B, D_IN, D_OUT, HIDDEN = 512, 16, 8, 32
    B_TILE = 128  # 4 batch tiles x 2 passes = 8 grid steps

    key = jax.random.PRNGKey(0)
    k_par, k_x, k_eps = jax.random.split(key, 3)

    raw_params = make_raw_params(k_par, D_IN, D_OUT, HIDDEN)
    x = jax.random.normal(k_x, (B, D_IN), dtype=jnp.float32)
    # Stochastic path: eps ~ N(0,1), noise_dim = output_dim, sampled outside the
    # kernel for determinism (stand-in for torch.randn in forward()).
    eps = jax.random.normal(k_eps, (B, D_OUT), dtype=jnp.float32)

    out, mask = masked_stochastic_resnet(x, eps, raw_params, b_tile=B_TILE)
    jax.block_until_ready((out, mask))

    ref_X, ref_raw_sum = reference(x, eps, raw_params)
    ref_mask = ref_raw_sum > 0.0

    assert out.shape == (B, D_OUT) and mask.shape == (B,) and mask.dtype == jnp.bool_
    assert np.allclose(np.asarray(out), np.asarray(ref_X), rtol=2e-4, atol=2e-4)
    # Mask fusion is algebraically exact but reassociates the sum; only compare rows
    # whose raw.sum is not within float noise of the threshold.
    decisive = np.abs(np.asarray(ref_raw_sum)) > 1e-3
    assert np.array_equal(np.asarray(mask)[decisive], np.asarray(ref_mask)[decisive])

    print("KERNEL_OK")
</pallas_src>

<mosaic_0001>
module attributes {stable_mosaic.version = 11 : i64} {
  func.func @kernel(%arg0: i32, %arg1: i32, %arg2: memref<128x24xf32, #tpu.memory_space<vmem>>, %arg3: memref<24x32xf32, #tpu.memory_space<vmem>>, %arg4: memref<32x32xf32, #tpu.memory_space<vmem>>, %arg5: memref<32x32xf32, #tpu.memory_space<vmem>>, %arg6: memref<8x32xf32, #tpu.memory_space<vmem>>, %arg7: memref<128x32xf32, #tpu.memory_space<vmem>>, %arg8: memref<2x32xf32, #tpu.memory_space<vmem>>) attributes {dimension_semantics = [#tpu.dimension_semantics<arbitrary>, #tpu.dimension_semantics<arbitrary>], iteration_bounds = array<i64: 2, 4>, scalar_prefetch = 0 : i64, scratch_operands = 1 : i64, tpu.core_type = #tpu.core_type<tc>, window_params = [{transform_indices = @transform_0, window_bounds = array<i64: 128, 24>}, {pipeline_mode = #tpu.pipeline_mode<synchronous>, transform_indices = @transform_1, window_bounds = array<i64: 24, 32>}, {pipeline_mode = #tpu.pipeline_mode<synchronous>, transform_indices = @transform_2, window_bounds = array<i64: 32, 32>}, {pipeline_mode = #tpu.pipeline_mode<synchronous>, transform_indices = @transform_3, window_bounds = array<i64: 32, 32>}, {pipeline_mode = #tpu.pipeline_mode<synchronous>, transform_indices = @transform_4, window_bounds = array<i64: 8, 32>}, {transform_indices = @transform_5, window_bounds = array<i64: 128, 32>}]} {
    %c0_i32 = arith.constant 0 : i32
    %0 = arith.cmpi eq, %arg0, %c0_i32 : i32
    %1 = arith.extui %0 : i1 to i32
    %c0_i32_0 = arith.constant 0 : i32
    %2 = arith.cmpi ne, %1, %c0_i32_0 : i32
    scf.if %2 {
      %c0_i32_2 = arith.constant 0 : i32
      %6 = arith.cmpi eq, %arg1, %c0_i32_2 : i32
      %7 = arith.extui %6 : i1 to i32
      %c0_i32_3 = arith.constant 0 : i32
      %8 = arith.cmpi ne, %7, %c0_i32_3 : i32
      scf.if %8 {
        %cst_19 = arith.constant 0.000000e+00 : f32
        %29 = vector.broadcast %cst_19 : f32 to vector<2x32xf32>
        %c0_20 = arith.constant 0 : index
        %c0_21 = arith.constant 0 : index
        %30 = vector.load %arg8[%c0_20, %c0_21] : memref<2x32xf32, #tpu.memory_space<vmem>>, vector<2x32xf32>
        tpu.vector_store %arg8[%c0_20, %c0_21], %29 {strides = array<i32>} : memref<2x32xf32, #tpu.memory_space<vmem>>, vector<2x32xf32>,
      } else {
      }
      %c0 = arith.constant 0 : index
      %c0_4 = arith.constant 0 : index
      %9 = vector.load %arg2[%c0, %c0_4] : memref<128x24xf32, #tpu.memory_space<vmem>>, vector<128x24xf32>
      %c0_5 = arith.constant 0 : index
      %c0_6 = arith.constant 0 : index
      %10 = vector.load %arg3[%c0_5, %c0_6] : memref<24x32xf32, #tpu.memory_space<vmem>>, vector<24x32xf32>
      %cst = arith.constant dense<0.000000e+00> : vector<128x32xf32>
      %11 = tpu.matmul %9, %10, %cst {dimension_numbers = #tpu.dot_dimension_numbers<[1], [0], [0], [1], [0, 0, 1, 1], [], []>} : vector<128x24xf32>, vector<24x32xf32>, vector<128x32xf32> -> vector<128x32xf32>
      %c0_7 = arith.constant 0 : index
      %c0_8 = arith.constant 0 : index
      %12 = vector.load %arg6[%c0_7, %c0_8] : memref<8x32xf32, #tpu.memory_space<vmem>>, vector<1x32xf32>
      %13 = vector.broadcast %12 : vector<1x32xf32> to vector<128x32xf32>
      %14 = arith.addf %11, %13 : vector<128x32xf32>
      %c0_9 = arith.constant 0 : index
      %c0_10 = arith.constant 0 : index
      %15 = vector.load %arg8[%c0_9, %c0_10] : memref<2x32xf32, #tpu.memory_space<vmem>>, vector<1x32xf32>
      %cst_11 = arith.constant dense<0.000000e+00> : vector<32xf32>
      %16 = vector.multi_reduction <add>, %14, %cst_11 [0] : vector<128x32xf32> to vector<32xf32>
      %17 = vector.shape_cast %16 : vector<32xf32> to vector<1x32xf32>
      %18 = arith.addf %15, %17 : vector<1x32xf32>
      %c0_12 = arith.constant 0 : index
      %c0_13 = arith.constant 0 : index
      %19 = vector.load %arg8[%c0_12, %c0_13] : memref<2x32xf32, #tpu.memory_space<vmem>>, vector<1x32xf32>
      tpu.vector_store %arg8[%c0_12, %c0_13], %18 {strides = array<i32>} : memref<2x32xf32, #tpu.memory_space<vmem>>, vector<1x32xf32>,
      %c1 = arith.constant 1 : index
      %c0_14 = arith.constant 0 : index
      %20 = vector.load %arg8[%c1, %c0_14] : memref<2x32xf32, #tpu.memory_space<vmem>>, vector<1x32xf32>
      %21 = arith.mulf %14, %14 : vector<128x32xf32>
      %cst_15 = arith.constant dense<0.000000e+00> : vector<32xf32>
      %22 = vector.multi_reduction <add>, %21, %cst_15 [0] : vector<128x32xf32> to vector<32xf32>
      %23 = vector.shape_cast %22 : vector<32xf32> to vector<1x32xf32>
      %24 = arith.addf %20, %23 : vector<1x32xf32>
      %c1_16 = arith.constant 1 : index
      %c0_17 = arith.constant 0 : index
      %25 = vector.load %arg8[%c1_16, %c0_17] : memref<2x32xf32, #tpu.memory_space<vmem>>, vector<1x32xf32>
      tpu.vector_store %arg8[%c1_16, %c0_17], %24 {strides = array<i32>} : memref<2x32xf32, #tpu.memory_space<vmem>>, vector<1x32xf32>,
      %c3_i32 = arith.constant 3 : i32
      %26 = arith.cmpi eq, %arg1, %c3_i32 : i32
      %27 = arith.extui %26 : i1 to i32
      %c0_i32_18 = arith.constant 0 : i32
      %28 = arith.cmpi ne, %27, %c0_i32_18 : i32
      scf.if %28 {
        %c0_19 = arith.constant 0 : index
        %c0_20 = arith.constant 0 : index
        %29 = vector.load %arg8[%c0_19, %c0_20] : memref<2x32xf32, #tpu.memory_space<vmem>>, vector<1x32xf32>
        %c1_21 = arith.constant 1 : index
        %c0_22 = arith.constant 0 : index
        %30 = vector.load %arg8[%c1_21, %c0_22] : memref<2x32xf32, #tpu.memory_space<vmem>>, vector<1x32xf32>
        %cst_23 = arith.constant 0.001953125 : f32
        %31 = vector.broadcast %cst_23 : f32 to vector<1x32xf32>
        %32 = arith.mulf %29, %31 : vector<1x32xf32>
        %cst_24 = arith.constant 0.001953125 : f32
        %33 = vector.broadcast %cst_24 : f32 to vector<1x32xf32>
        %34 = arith.mulf %30, %33 : vector<1x32xf32>
        %35 = arith.mulf %32, %32 : vector<1x32xf32>
        %36 = arith.subf %34, %35 : vector<1x32xf32>
        %c1_25 = arith.constant 1 : index
        %c0_26 = arith.constant 0 : index
        %37 = vector.load %arg6[%c1_25, %c0_26] : memref<8x32xf32, #tpu.memory_space<vmem>>, vector<1x32xf32>
        %cst_27 = arith.constant 9.99999974E-6 : f32
        %38 = vector.broadcast %cst_27 : f32 to vector<1x32xf32>
        %39 = arith.addf %36, %38 : vector<1x32xf32>
        %40 = math.rsqrt %39 : vector<1x32xf32>
        %41 = arith.mulf %37, %40 : vector<1x32xf32>
        %c0_28 = arith.constant 0 : index
        %c0_29 = arith.constant 0 : index
        %42 = vector.load %arg8[%c0_28, %c0_29] : memref<2x32xf32, #tpu.memory_space<vmem>>, vector<1x32xf32>
        tpu.vector_store %arg8[%c0_28, %c0_29], %41 {strides = array<i32>} : memref<2x32xf32, #tpu.memory_space<vmem>>, vector<1x32xf32>,
        %c2 = arith.constant 2 : index
        %c0_30 = arith.constant 0 : index
        %43 = vector.load %arg6[%c2, %c0_30] : memref<8x32xf32, #tpu.memory_space<vmem>>, vector<1x32xf32>
        %44 = arith.mulf %32, %41 : vector<1x32xf32>
        %45 = arith.subf %43, %44 : vector<1x32xf32>
        %c1_31 = arith.constant 1 : index
        %c0_32 = arith.constant 0 : index
        %46 = vector.load %arg8[%c1_31, %c0_32] : memref<2x32xf32, #tpu.memory_space<vmem>>, vector<1x32xf32>
        tpu.vector_store %arg8[%c1_31, %c0_32], %45 {strides = array<i32>} : memref<2x32xf32, #tpu.memory_space<vmem>>, vector<1x32xf32>,
      } else {
      }
    } else {
    }
    %c1_i32 = arith.constant 1 : i32
    %3 = arith.cmpi eq, %arg0, %c1_i32 : i32
    %4 = arith.extui %3 : i1 to i32
    %c0_i32_1 = arith.constant 0 : i32
    %5 = arith.cmpi ne, %4, %c0_i32_1 : i32
    scf.if %5 {
      %c0 = arith.constant 0 : index
      %c0_2 = arith.constant 0 : index
      %6 = vector.load %arg2[%c0, %c0_2] : memref<128x24xf32, #tpu.memory_space<vmem>>, vector<128x24xf32>
      %c0_3 = arith.constant 0 : index
      %c0_4 = arith.constant 0 : index
      %7 = vector.load %arg3[%c0_3, %c0_4] : memref<24x32xf32, #tpu.memory_space<vmem>>, vector<24x32xf32>
      %cst = arith.constant dense<0.000000e+00> : vector<128x32xf32>
      %8 = tpu.matmul %6, %7, %cst {dimension_numbers = #tpu.dot_dimension_numbers<[1], [0], [0], [1], [0, 0, 1, 1], [], []>} : vector<128x24xf32>, vector<24x32xf32>, vector<128x32xf32> -> vector<128x32xf32>
      %c0_5 = arith.constant 0 : index
      %c0_6 = arith.constant 0 : index
      %9 = vector.load %arg6[%c0_5, %c0_6] : memref<8x32xf32, #tpu.memory_space<vmem>>, vector<1x32xf32>
      %10 = vector.broadcast %9 : vector<1x32xf32> to vector<128x32xf32>
      %11 = arith.addf %8, %10 : vector<128x32xf32>
      %c0_7 = arith.constant 0 : index
      %c0_8 = arith.constant 0 : index
      %12 = vector.load %arg8[%c0_7, %c0_8] : memref<2x32xf32, #tpu.memory_space<vmem>>, vector<1x32xf32>
      %13 = vector.broadcast %12 : vector<1x32xf32> to vector<128x32xf32>
      %14 = arith.mulf %11, %13 : vector<128x32xf32>
      %c1 = arith.constant 1 : index
      %c0_9 = arith.constant 0 : index
      %15 = vector.load %arg8[%c1, %c0_9] : memref<2x32xf32, #tpu.memory_space<vmem>>, vector<1x32xf32>
      %16 = vector.broadcast %15 : vector<1x32xf32> to vector<128x32xf32>
      %17 = arith.addf %14, %16 : vector<128x32xf32>
      %cst_10 = arith.constant 0.000000e+00 : f32
      %18 = vector.broadcast %cst_10 : f32 to vector<128x32xf32>
      %19 = arith.maximumf %17, %18 : vector<128x32xf32>
      %c0_11 = arith.constant 0 : index
      %c0_12 = arith.constant 0 : index
      %20 = vector.load %arg4[%c0_11, %c0_12] : memref<32x32xf32, #tpu.memory_space<vmem>>, vector<32x32xf32>
      %cst_13 = arith.constant dense<0.000000e+00> : vector<128x32xf32>
      %21 = tpu.matmul %19, %20, %cst_13 {dimension_numbers = #tpu.dot_dimension_numbers<[1], [0], [0], [1], [0, 0, 1, 1], [], []>} : vector<128x32xf32>, vector<32x32xf32>, vector<128x32xf32> -> vector<128x32xf32>
      %c3 = arith.constant 3 : index
      %c0_14 = arith.constant 0 : index
      %22 = vector.load %arg6[%c3, %c0_14] : memref<8x32xf32, #tpu.memory_space<vmem>>, vector<1x32xf32>
      %23 = vector.broadcast %22 : vector<1x32xf32> to vector<128x32xf32>
      %24 = arith.addf %21, %23 : vector<128x32xf32>
      %25 = arith.addf %24, %11 : vector<128x32xf32>
      %c0_15 = arith.constant 0 : index
      %c0_16 = arith.constant 0 : index
      %26 = vector.load %arg5[%c0_15, %c0_16] : memref<32x32xf32, #tpu.memory_space<vmem>>, vector<32x32xf32>
      %cst_17 = arith.constant dense<0.000000e+00> : vector<128x32xf32>
      %27 = tpu.matmul %25, %26, %cst_17 {dimension_numbers = #tpu.dot_dimension_numbers<[1], [0], [0], [1], [0, 0, 1, 1], [], []>} : vector<128x32xf32>, vector<32x32xf32>, vector<128x32xf32> -> vector<128x32xf32>
      %c4 = arith.constant 4 : index
      %c0_18 = arith.constant 0 : index
      %28 = vector.load %arg6[%c4, %c0_18] : memref<8x32xf32, #tpu.memory_space<vmem>>, vector<1x32xf32>
      %29 = vector.broadcast %28 : vector<1x32xf32> to vector<128x32xf32>
      %30 = arith.addf %27, %29 : vector<128x32xf32>
      %c0_19 = arith.constant 0 : index
      %c0_20 = arith.constant 0 : index
      %31 = vector.load %arg7[%c0_19, %c0_20] : memref<128x32xf32, #tpu.memory_space<vmem>>, vector<128x32xf32>
      tpu.vector_store %arg7[%c0_19, %c0_20], %30 {strides = array<i32>} : memref<128x32xf32, #tpu.memory_space<vmem>>, vector<128x32xf32>,
    } else {
    }
    return
  }
  func.func @transform_0(%arg0: i32, %arg1: i32) -> (i32, i32) {
    %c0_i32 = arith.constant 0 : i32
    %c0_i32_0 = arith.constant 0 : i32
    return %arg1, %c0_i32 : i32, i32
  }
  func.func @transform_1(%arg0: i32, %arg1: i32) -> (i32, i32) {
    %c0_i32 = arith.constant 0 : i32
    %c0_i32_0 = arith.constant 0 : i32
    %c0_i32_1 = arith.constant 0 : i32
    return %c0_i32, %c0_i32_0 : i32, i32
  }
  func.func @transform_2(%arg0: i32, %arg1: i32) -> (i32, i32) {
    %c0_i32 = arith.constant 0 : i32
    %c0_i32_0 = arith.constant 0 : i32
    %c0_i32_1 = arith.constant 0 : i32
    return %c0_i32, %c0_i32_0 : i32, i32
  }
  func.func @transform_3(%arg0: i32, %arg1: i32) -> (i32, i32) {
    %c0_i32 = arith.constant 0 : i32
    %c0_i32_0 = arith.constant 0 : i32
    %c0_i32_1 = arith.constant 0 : i32
    return %c0_i32, %c0_i32_0 : i32, i32
  }
  func.func @transform_4(%arg0: i32, %arg1: i32) -> (i32, i32) {
    %c0_i32 = arith.constant 0 : i32
    %c0_i32_0 = arith.constant 0 : i32
    %c0_i32_1 = arith.constant 0 : i32
    return %c0_i32, %c0_i32_0 : i32, i32
  }
  func.func @transform_5(%arg0: i32, %arg1: i32) -> (i32, i32) {
    %c0_i32 = arith.constant 0 : i32
    %c0_i32_0 = arith.constant 0 : i32
    return %arg1, %c0_i32 : i32, i32
  }
}

</mosaic_0001>

<llo_original>
// kernel: masked_stochastic_resnet.1
$region0: #{masked_stochastic_resnet.1}
  #allocation0 [shape = 'u32[]', space=smem, size = 0x4, offset = 0x4, fixed_abs, tag = 'smem constant byte address 0x4 - core index']
  #allocation1 [shape = 'u32[72,128]{1,0:T(1,128)}', space=vmem, size = 0x9000, scoped, tag = 'internal scratch']
  #allocation2 [shape = 'f32[2,32]{1,0:T(2,128)}', space=vmem, size = 0x400, scoped, tag = 'scratch operand']
  %s0 = inlined_call_operand.vmem [shape: f32[512,24], index: 0, kind: input, shape index: {}]
  %s1 = inlined_call_operand.vmem [shape: f32[24,32], index: 1, kind: input, shape index: {}]
  %s2 = inlined_call_operand.vmem [shape: f32[32,32], index: 2, kind: input, shape index: {}]
  %s3 = inlined_call_operand.vmem [shape: f32[32,32], index: 3, kind: input, shape index: {}]
  %s4 = inlined_call_operand.vmem [shape: f32[8,32], index: 4, kind: input, shape index: {}]
  %s5 = inlined_call_operand.vmem [shape: f32[512,32], index: 5, kind: output, shape index: {}]
  %s6 = sld [smem:[#allocation0]]
  $region69: #{masked_stochastic_resnet.1} parent=0
    _
  %s8 = ssub.s32 1, %s6
  %s9 = scalar_select 0, %s8, %s6
  loop: start=0, step=1, limit=10
  $region2: #{masked_stochastic_resnet.1} parent=0 // loop_pre_header
    _
  $region3: #{masked_stochastic_resnet.1} parent=0 // loop_header
    %s11 = sphi 0, %s15
    %p12 = scmp.ge.s32.totalorder %s11, 10
    %s18 = sphi 0, %s30
    %s19 = sphi 0, %s26
    %s20 = sphi 0, %s18
    %s21 = sphi 0, %s19
    %s22 = sphi 0, %s20
    %s23 = sphi 0, %s21
    %s33 = sphi 0, %s35
    %s36 = sphi 0, %s33
    %s37 = sphi 0, %s36
    %s53 = sphi 0, %s37
    %s57 = sphi 0, %s57
    %s59 = sphi 0, %s57
    %s60 = sphi 0, %s59
    %s74 = sphi 0, %s60
    %s78 = sphi 0, %s78
    %s80 = sphi 0, %s78
    %s81 = sphi 0, %s80
    %s95 = sphi 0, %s81
    %s99 = sphi 0, %s99
    %s101 = sphi 0, %s99
    %s102 = sphi 0, %s101
    %s116 = sphi 0, %s102
    %s120 = sphi 0, %s120
    %s122 = sphi 0, %s120
    %s123 = sphi 0, %s122
    %s137 = sphi 0, %s123
    %s143 = sphi 0, %s145
    %s146 = sphi 0, %s143
    %s147 = sphi 0, %s146
    %s163 = sphi 0, %s147
  $region4: #{masked_stochastic_resnet.1} parent=0 // loop_header_branch
    %14 = sbr.rel (%p12) target = $region8
  $region5: #{masked_stochastic_resnet.1} parent=0 // loop_body
    %s16 = ssub.s32 %s11, 1
    %s17 = ssub.s32 %s11, 2
    %s24 = sadd.s32 1, %s19
    %p25 = scmp.ge.s32.totalorder %s24, 4
    %s26 = scalar_select %p25, 0, %s24
    %s27 = sadd.s32 1, %s18
    %s28 = scalar_select %p25, %s27, %s18
    %p29 = scmp.ge.s32.totalorder %s28, 2
    %s30 = scalar_select %p29, 0, %s28
    %s31 = ssub.s32 %s19, %s26
    %p32 = scmp.eq.s32.totalorder %s31, 0
    %s34 = sadd.s32 %s33, 1
    %s35 = scalar_select %p32, %s33, %s34
    %p38 = pneg %p32
    %p39 = scmp.eq.s32.totalorder %s11, 7
    %p40 = por %p38, %p39
    %p41 = scmp.ne.s32.totalorder %s33, %s36
    %p42 = scmp.eq.s32.totalorder %s11, 0
    %p43 = por %p41, %p42
    %p44 = scmp.ne.s32.totalorder %s33, %s36
    %p45 = scmp.eq.s32.totalorder %s16, 7
    %p46 = por %p44, %p45
    %p47 = scmp.ne.s32.totalorder %s36, %s37
    %p48 = scmp.eq.s32.totalorder %s16, 0
    %p49 = por %p47, %p48
    %p50 = scmp.ne.s32.totalorder %s36, %s37
    %p51 = scmp.eq.s32.totalorder %s17, 7
    %p52 = por %p50, %p51
    %p54 = scmp.ne.s32.totalorder %s37, %s53
    %p55 = scmp.eq.s32.totalorder %s17, 0
    %p56 = por %p54, %p55
    %s58 = sadd.s32 %s57, 1
    %p61 = scmp.eq.s32.totalorder %s11, 7
    %p62 = scmp.ne.s32.totalorder %s57, %s59
    %p63 = scmp.eq.s32.totalorder %s11, 0
    %p64 = por %p62, %p63
    %p65 = scmp.ne.s32.totalorder %s57, %s59
    %p66 = scmp.eq.s32.totalorder %s16, 7
    %p67 = por %p65, %p66
    %p68 = scmp.ne.s32.totalorder %s59, %s60
    %p69 = scmp.eq.s32.totalorder %s16, 0
    %p70 = por %p68, %p69
    %p71 = scmp.ne.s32.totalorder %s59, %s60
    %p72 = scmp.eq.s32.totalorder %s17, 7
    %p73 = por %p71, %p72
    %p75 = scmp.ne.s32.totalorder %s60, %s74
    %p76 = scmp.eq.s32.totalorder %s17, 0
    %p77 = por %p75, %p76
    %s79 = sadd.s32 %s78, 1
    %p82 = scmp.eq.s32.totalorder %s11, 7
    %p83 = scmp.ne.s32.totalorder %s78, %s80
    %p84 = scmp.eq.s32.totalorder %s11, 0
    %p85 = por %p83, %p84
    %p86 = scmp.ne.s32.totalorder %s78, %s80
    %p87 = scmp.eq.s32.totalorder %s16, 7
    %p88 = por %p86, %p87
    %p89 = scmp.ne.s32.totalorder %s80, %s81
    %p90 = scmp.eq.s32.totalorder %s16, 0
    %p91 = por %p89, %p90
    %p92 = scmp.ne.s32.totalorder %s80, %s81
    %p93 = scmp.eq.s32.totalorder %s17, 7
    %p94 = por %p92, %p93
    %p96 = scmp.ne.s32.totalorder %s81, %s95
    %p97 = scmp.eq.s32.totalorder %s17, 0
    %p98 = por %p96, %p97
    %s100 = sadd.s32 %s99, 1
    %p103 = scmp.eq.s32.totalorder %s11, 7
    %p104 = scmp.ne.s32.totalorder %s99, %s101
    %p105 = scmp.eq.s32.totalorder %s11, 0
    %p106 = por %p104, %p105
    %p107 = scmp.ne.s32.totalorder %s99, %s101
    %p108 = scmp.eq.s32.totalorder %s16, 7
    %p109 = por %p107, %p108
    %p110 = scmp.ne.s32.totalorder %s101, %s102
    %p111 = scmp.eq.s32.totalorder %s16, 0
    %p112 = por %p110, %p111
    %p113 = scmp.ne.s32.totalorder %s101, %s102
    %p114 = scmp.eq.s32.totalorder %s17, 7
    %p115 = por %p113, %p114
    %p117 = scmp.ne.s32.totalorder %s102, %s116
    %p118 = scmp.eq.s32.totalorder %s17, 0
    %p119 = por %p117, %p118
    %s121 = sadd.s32 %s120, 1
    %p124 = scmp.eq.s32.totalorder %s11, 7
    %p125 = scmp.ne.s32.totalorder %s120, %s122
    %p126 = scmp.eq.s32.totalorder %s11, 0
    %p127 = por %p125, %p126
    %p128 = scmp.ne.s32.totalorder %s120, %s122
    %p129 = scmp.eq.s32.totalorder %s16, 7
    %p130 = por %p128, %p129
    %p131 = scmp.ne.s32.totalorder %s122, %s123
    %p132 = scmp.eq.s32.totalorder %s16, 0
    %p133 = por %p131, %p132
    %p134 = scmp.ne.s32.totalorder %s122, %s123
    %p135 = scmp.eq.s32.totalorder %s17, 7
    %p136 = por %p134, %p135
    %p138 = scmp.ne.s32.totalorder %s123, %s137
    %p139 = scmp.eq.s32.totalorder %s17, 0
    %p140 = por %p138, %p139
    %s141 = ssub.s32 %s19, %s26
    %p142 = scmp.eq.s32.totalorder %s141, 0
    %s144 = sadd.s32 %s143, 1
    %s145 = scalar_select %p142, %s143, %s144
    %p148 = pneg %p142
    %p149 = scmp.eq.s32.totalorder %s11, 7
    %p150 = por %p148, %p149
    %p151 = scmp.ne.s32.totalorder %s143, %s146
    %p152 = scmp.eq.s32.totalorder %s11, 0
    %p153 = por %p151, %p152
    %p154 = scmp.ne.s32.totalorder %s143, %s146
    %p155 = scmp.eq.s32.totalorder %s16, 7
    %p156 = por %p154, %p155
    %p157 = scmp.ne.s32.totalorder %s146, %s147
    %p158 = scmp.eq.s32.totalorder %s16, 0
    %p159 = por %p157, %p158
    %p160 = scmp.ne.s32.totalorder %s146, %s147
    %p161 = scmp.eq.s32.totalorder %s17, 7
    %p162 = por %p160, %p161
    %p164 = scmp.ne.s32.totalorder %s147, %s163
    %p165 = scmp.eq.s32.totalorder %s17, 0
    %p166 = por %p164, %p165
    %p167 = scmp.le.s32.totalorder 1, %s11
    %p168 = scmp.lt.s32.totalorder %s11, 9
    %p169 = pnand %p167, %p168
    %p170 = pneg %p169
    // Predicated region
    $region9: #{masked_stochastic_resnet.1} parent=5 // pred_check
      _
    $region10: #{masked_stochastic_resnet.1} parent=5 // pred_check_branch
      %172 = sbr.rel (%p169) target = $region12
    $region11: #{masked_stochastic_resnet.1} parent=5 // pred_region
      %s173 = ssub.s32 %s11, 1
      // Predicated region
      $region13: #{masked_stochastic_resnet.1} parent=11 // pred_check
        %p174 = pneg %p70
      $region14: #{masked_stochastic_resnet.1} parent=11 // pred_check_branch
        %176 = sbr.rel (%p174) target = $region16
      $region15: #{masked_stochastic_resnet.1} parent=11 // pred_region
        _
      $region16: #{masked_stochastic_resnet.1} parent=11 // pred_fallthru
        _
      // Predicated region
      $region17: #{masked_stochastic_resnet.1} parent=11 // pred_check
        %p177 = pneg %p91
      $region18: #{masked_stochastic_resnet.1} parent=11 // pred_check_branch
        %179 = sbr.rel (%p177) target = $region20
      $region19: #{masked_stochastic_resnet.1} parent=11 // pred_region
        _
      $region20: #{masked_stochastic_resnet.1} parent=11 // pred_fallthru
        _
      // Predicated region
      $region21: #{masked_stochastic_resnet.1} parent=11 // pred_check
        %p180 = pneg %p112
      $region22: #{masked_stochastic_resnet.1} parent=11 // pred_check_branch
        %182 = sbr.rel (%p180) target = $region24
      $region23: #{masked_stochastic_resnet.1} parent=11 // pred_region
        _
      $region24: #{masked_stochastic_resnet.1} parent=11 // pred_fallthru
        _
      // Predicated region
      $region25: #{masked_stochastic_resnet.1} parent=11 // pred_check
        %p183 = pneg %p133
      $region26: #{masked_stochastic_resnet.1} parent=11 // pred_check_branch
        %185 = sbr.rel (%p183) target = $region28
      $region27: #{masked_stochastic_resnet.1} parent=11 // pred_region
        _
      $region28: #{masked_stochastic_resnet.1} parent=11 // pred_fallthru
        _
    $region12: #{masked_stochastic_resnet.1} parent=5 // pred_fallthru
      _
    %p186 = scmp.lt.s32.totalorder %s11, 8
    // Predicated region
    $region29: #{masked_stochastic_resnet.1} parent=5 // pred_check
      %p187 = pneg %p186
    $region30: #{masked_stochastic_resnet.1} parent=5 // pred_check_branch
      %189 = sbr.rel (%p187) target = $region32
    $region31: #{masked_stochastic_resnet.1} parent=5 // pred_region
      // Predicated region
      $region33: #{masked_stochastic_resnet.1} parent=31 // pred_check
        %p190 = pneg %p43
      $region34: #{masked_stochastic_resnet.1} parent=31 // pred_check_branch
        %192 = sbr.rel (%p190) target = $region36
      $region35: #{masked_stochastic_resnet.1} parent=31 // pred_region
        %s193 = smul.u32 16, %s19
        %p194 = scmp.lt.s32.totalorder %s193, 63
        %s195 = scalar_select %p194, %s193, 63
        %s196 = smul.addr %s195, 8
        %s197 = scalar_lea.vmem %s0, %s196
        %s198 = smul.u32 16, %s19
      $region36: #{masked_stochastic_resnet.1} parent=31 // pred_fallthru
        _
    $region32: #{masked_stochastic_resnet.1} parent=5 // pred_fallthru
      _
    %p199 = scmp.le.s32.totalorder 1, %s11
    %p200 = scmp.lt.s32.totalorder %s11, 9
    %p201 = pnand %p199, %p200
    %p202 = pneg %p201
    // Predicated region
    $region37: #{masked_stochastic_resnet.1} parent=5 // pred_check
      _
    $region38: #{masked_stochastic_resnet.1} parent=5 // pred_check_branch
      %204 = sbr.rel (%p201) target = $region40
    $region39: #{masked_stochastic_resnet.1} parent=5 // pred_region
      %s205 = ssub.s32 %s11, 1
      %s206 = smul.u32 16, %s21
      %p207 = scmp.lt.s32.totalorder %s206, 63
      %s208 = scalar_select %p207, %s206, 63
      %s209 = smul.addr %s208, 8
      %s210 = scalar_lea.vmem %s0, %s209
      %p211 = pneg %p49
      %p212 = pneg %p46
      %p213 = pneg %p70
      %p214 = pneg %p67
      %p215 = pneg %p91
      %p216 = pneg %p88
      %p217 = pneg %p112
      %p218 = pneg %p109
      %p219 = pneg %p133
      %p220 = pneg %p130
      %p221 = pneg %p159
      %p222 = pneg %p156
      %s223 = smul.u32 16, %s21
      %p224 = scmp.lt.s32.totalorder %s223, 63
      %s225 = scalar_select %p224, %s223, 63
      %s226 = smul.addr %s225, 8
      %s227 = scalar_lea.vmem %s5, %s226
      %s228 = smul.u32 16, %s21
      %p229 = scmp.lt.s32.totalorder %s228, 63
      %s230 = scalar_select %p229, %s228, 63
      %s231 = smul.addr %s230, 8
      %s232 = scalar_lea.vmem %s0, %s231
      %s233 = smul.u32 16, %s21
      %s234 = smul.u32 16, %s21
      %p235 = scmp.lt.s32.totalorder %s234, 63
      %s236 = scalar_select %p235, %s234, 63
      %s237 = smul.addr %s236, 8
      %s238 = scalar_lea.vmem %s5, %s237
      %s239 = smul.u32 16, %s21
      %p240 = scmp.eq.s32.totalorder %s20, 0
      // Predicated region
      $region41: #{masked_stochastic_resnet.1} parent=39 // pred_check
        %p241 = pneg %p240
      $region42: #{masked_stochastic_resnet.1} parent=39 // pred_check_branch
        %243 = sbr.rel (%p241) target = $region44
      $region43: #{masked_stochastic_resnet.1} parent=39 // pred_region
        %p244 = scmp.eq.s32.totalorder %s21, 0
        // Predicated region
        $region45: #{masked_stochastic_resnet.1} parent=43 // pred_check
          %p245 = pneg %p244
        $region46: #{masked_stochastic_resnet.1} parent=43 // pred_check_branch
          %247 = sbr.rel (%p245) target = $region48
        $region47: #{masked_stochastic_resnet.1} parent=43 // pred_region
          %vm248 = vcmask 254976
          %249 = vst.msk [vmem:[#allocation2] sm:$0x3] %vm248, 0.0
        $region48: #{masked_stochastic_resnet.1} parent=43 // pred_fallthru
          _
        %v250 = vld [vmem:[%s232] sm:$0xff]
        %v251 = vld [vmem:[%s232 + $0x8] sm:$0xff]
        %v252 = vld [vmem:[%s232 + $0x10] sm:$0xff]
        %v253 = vld [vmem:[%s232 + $0x18] sm:$0xff]
        %v254 = vld [vmem:[%s232 + $0x20] sm:$0xff]
        %v255 = vld [vmem:[%s232 + $0x28] sm:$0xff]
        %v256 = vld [vmem:[%s232 + $0x30] sm:$0xff]
        %v257 = vld [vmem:[%s232 + $0x38] sm:$0xff]
        %v258 = vld [vmem:[%s232 + $0x40] sm:$0xff]
        %v259 = vld [vmem:[%s232 + $0x48] sm:$0xff]
        %v260 = vld [vmem:[%s232 + $0x50] sm:$0xff]
        %v261 = vld [vmem:[%s232 + $0x58] sm:$0xff]
        %v262 = vld [vmem:[%s232 + $0x60] sm:$0xff]
        %v263 = vld [vmem:[%s232 + $0x68] sm:$0xff]
        %v264 = vld [vmem:[%s232 + $0x70] sm:$0xff]
        %v265 = vld [vmem:[%s232 + $0x78] sm:$0xff]
        %v266 = vld [vmem:[%s1] sm:$0xff]
        %v267 = vld [vmem:[%s1 + $0x8] sm:$0xff]
        %v268 = vld [vmem:[%s1 + $0x10] sm:$0xff]
        %v269 = vld [vmem:[%s4] sm:$0x1]
        %v270 = vperm.slane %v269, 0
        %vm271 = vcmask 195584
        %v273 = vsel %vm271, %v250, 0
        %v276 = vsel %vm271, %v251, 0
        %v279 = vsel %vm271, %v252, 0
        %v282 = vsel %vm271, %v253, 0
        %v285 = vsel %vm271, %v254, 0
        %v288 = vsel %vm271, %v255, 0
        %v291 = vsel %vm271, %v256, 0
        %v294 = vsel %vm271, %v257, 0
        %v297 = vsel %vm271, %v258, 0
        %v300 = vsel %vm271, %v259, 0
        %v303 = vsel %vm271, %v260, 0
        %v306 = vsel %vm271, %v261, 0
        %v309 = vsel %vm271, %v262, 0
        %v312 = vsel %vm271, %v263, 0
        %v315 = vsel %vm271, %v264, 0
        %v318 = vsel %vm271, %v265, 0
        %320 = vmatpush.msra.mxu0 0.0
        %321 = vmatpush.msra.mxu0 0.0
        %322 = vmatpush.msra.mxu0 0.0
        %323 = vmatpush.msra.mxu0 0.0
        %324 = vmatpush.msra.mxu0 0.0
        %325 = vmatpush.msra.mxu0 0.0
        %326 = vmatpush.msra.mxu0 0.0
        %327 = vmatpush.msra.mxu0 0.0
        %328 = vmatpush.msra.mxu0 0.0
        %329 = vmatpush.msra.mxu0 0.0
        %330 = vmatpush.msra.mxu0 0.0
        %331 = vmatpush.msra.mxu0 0.0
        %332 = vmatpush.msra.mxu0 0.0
        %333 = vmatpush.msra.mxu0 %v268
        %334 = vmatpush.msra.mxu0 %v267
        %335 = vmatpush.msra.mxu0 %v266
        %336 = vmatmul.f32.gmra.mxu0 %v273
        %v337 = vpop.f32.mrf.mxu0
        %v338 = vadd.f32 %v270, %v337
        %339 = vmatmul.f32.gmra.mxu0 %v276
        %v340 = vpop.f32.mrf.mxu0
        %v341 = vadd.f32 %v270, %v340
        %342 = vmatmul.f32.gmra.mxu0 %v279
        %v343 = vpop.f32.mrf.mxu0
        %v344 = vadd.f32 %v270, %v343
        %345 = vmatmul.f32.gmra.mxu0 %v282
        %v346 = vpop.f32.mrf.mxu0
        %v347 = vadd.f32 %v270, %v346
        %348 = vmatmul.f32.gmra.mxu0 %v285
        %v349 = vpop.f32.mrf.mxu0
        %v350 = vadd.f32 %v270, %v349
        %351 = vmatmul.f32.gmra.mxu0 %v288
        %v352 = vpop.f32.mrf.mxu0
        %v353 = vadd.f32 %v270, %v352
        %354 = vmatmul.f32.gmra.mxu0 %v291
        %v355 = vpop.f32.mrf.mxu0
        %v356 = vadd.f32 %v270, %v355
        %357 = vmatmul.f32.gmra.mxu0 %v294
        %v358 = vpop.f32.mrf.mxu0
        %v359 = vadd.f32 %v270, %v358
        %360 = vmatmul.f32.gmra.mxu0 %v297
        %v361 = vpop.f32.mrf.mxu0
        %v362 = vadd.f32 %v270, %v361
        %363 = vmatmul.f32.gmra.mxu0 %v300
        %v364 = vpop.f32.mrf.mxu0
        %v365 = vadd.f32 %v270, %v364
        %366 = vmatmul.f32.gmra.mxu0 %v303
        %v367 = vpop.f32.mrf.mxu0
        %v368 = vadd.f32 %v270, %v367
        %369 = vmatmul.f32.gmra.mxu0 %v306
        %v370 = vpop.f32.mrf.mxu0
        %v371 = vadd.f32 %v270, %v370
        %372 = vmatmul.f32.gmra.mxu0 %v309
        %v373 = vpop.f32.mrf.mxu0
        %v374 = vadd.f32 %v270, %v373
        %375 = vmatmul.f32.gmra.mxu0 %v312
        %v376 = vpop.f32.mrf.mxu0
        %v377 = vadd.f32 %v270, %v376
        %378 = vmatmul.f32.gmra.mxu0 %v315
        %v379 = vpop.f32.mrf.mxu0
        %v380 = vadd.f32 %v270, %v379
        %381 = vmatmul.f32.gmra.mxu0 %v318
        %v382 = vpop.f32.mrf.mxu0
        %v383 = vadd.f32 %v270, %v382
        %384 = vdwg.mxu0
        %v385 = vld [vmem:[#allocation2] sm:$0x1]
        %vm386 = vcmask 261120
        %v387 = vsel %vm386, %v338, 0.0
        %v388 = vsel %vm386, %v341, 0.0
        %v389 = vadd.f32 %v387, %v388
        %v390 = vsel %vm386, %v344, 0.0
        %v391 = vadd.f32 %v389, %v390
        %v392 = vsel %vm386, %v347, 0.0
        %v393 = vadd.f32 %v391, %v392
        %v394 = vsel %vm386, %v350, 0.0
        %v395 = vadd.f32 %v393, %v394
        %v396 = vsel %vm386, %v353, 0.0
        %v397 = vadd.f32 %v395, %v396
        %v398 = vsel %vm386, %v356, 0.0
        %v399 = vadd.f32 %v397, %v398
        %v400 = vsel %vm386, %v359, 0.0
        %v401 = vadd.f32 %v399, %v400
        %v402 = vsel %vm386, %v362, 0.0
        %v403 = vadd.f32 %v401, %v402
        %v404 = vsel %vm386, %v365, 0.0
        %v405 = vadd.f32 %v403, %v404
        %v406 = vsel %vm386, %v368, 0.0
        %v407 = vadd.f32 %v405, %v406
        %v408 = vsel %vm386, %v371, 0.0
        %v409 = vadd.f32 %v407, %v408
        %v410 = vsel %vm386, %v374, 0.0
        %v411 = vadd.f32 %v409, %v410
        %v412 = vsel %vm386, %v377, 0.0
        %v413 = vadd.f32 %v411, %v412
        %v414 = vsel %vm386, %v380, 0.0
        %v415 = vadd.f32 %v413, %v414
        %v416 = vsel %vm386, %v383, 0.0
        %v417 = vadd.f32 %v415, %v416
        %v418 = vrot.slane %v417, 4
        %v419 = vadd.f32 %v417, %v418
        %v420 = vrot.slane %v419, 2
        %v421 = vadd.f32 %v419, %v420
        %v422 = vrot.slane %v421, 1
        %v423 = vadd.f32 %v421, %v422
        %v424 = vadd.f32 %v385, %v423
        %vm425 = vcmask 253952
        %426 = vst.msk [vmem:[#allocation2] sm:$0x1] %vm425, %v424
        %v427 = vld [vmem:[#allocation2 + $0x1] sm:$0x1]
        %v428 = vmul.f32 %v338, %v338
        %v429 = vmul.f32 %v341, %v341
        %v430 = vmul.f32 %v344, %v344
        %v431 = vmul.f32 %v347, %v347
        %v432 = vmul.f32 %v350, %v350
        %v433 = vmul.f32 %v353, %v353
        %v434 = vmul.f32 %v356, %v356
        %v435 = vmul.f32 %v359, %v359
        %v436 = vmul.f32 %v362, %v362
        %v437 = vmul.f32 %v365, %v365
        %v438 = vmul.f32 %v368, %v368
        %v439 = vmul.f32 %v371, %v371
        %v440 = vmul.f32 %v374, %v374
        %v441 = vmul.f32 %v377, %v377
        %v442 = vmul.f32 %v380, %v380
        %v443 = vmul.f32 %v383, %v383
        %v444 = vsel %vm386, %v428, 0.0
        %v445 = vsel %vm386, %v429, 0.0
        %v446 = vadd.f32 %v444, %v445
        %v447 = vsel %vm386, %v430, 0.0
        %v448 = vadd.f32 %v446, %v447
        %v449 = vsel %vm386, %v431, 0.0
        %v450 = vadd.f32 %v448, %v449
        %v451 = vsel %vm386, %v432, 0.0
        %v452 = vadd.f32 %v450, %v451
        %v453 = vsel %vm386, %v433, 0.0
        %v454 = vadd.f32 %v452, %v453
        %v455 = vsel %vm386, %v434, 0.0
        %v456 = vadd.f32 %v454, %v455
        %v457 = vsel %vm386, %v435, 0.0
        %v458 = vadd.f32 %v456, %v457
        %v459 = vsel %vm386, %v436, 0.0
        %v460 = vadd.f32 %v458, %v459
        %v461 = vsel %vm386, %v437, 0.0
        %v462 = vadd.f32 %v460, %v461
        %v463 = vsel %vm386, %v438, 0.0
        %v464 = vadd.f32 %v462, %v463
        %v465 = vsel %vm386, %v439, 0.0
        %v466 = vadd.f32 %v464, %v465
        %v467 = vsel %vm386, %v440, 0.0
        %v468 = vadd.f32 %v466, %v467
        %v469 = vsel %vm386, %v441, 0.0
        %v470 = vadd.f32 %v468, %v469
        %v471 = vsel %vm386, %v442, 0.0
        %v472 = vadd.f32 %v470, %v471
        %v473 = vsel %vm386, %v443, 0.0
        %v474 = vadd.f32 %v472, %v473
        %v475 = vrot.slane %v474, 4
        %v476 = vadd.f32 %v474, %v475
        %v477 = vrot.slane %v476, 2
        %v478 = vadd.f32 %v476, %v477
        %v479 = vrot.slane %v478, 1
        %v480 = vadd.f32 %v478, %v479
        %v481 = vadd.f32 %v427, %v480
        %482 = vst.msk [vmem:[#allocation2 + $0x1] sm:$0x1] %vm425, %v481
        %p483 = scmp.eq.s32.totalorder %s21, 3
        // Predicated region
        $region49: #{masked_stochastic_resnet.1} parent=43 // pred_check
          %p484 = pneg %p483
        $region50: #{masked_stochastic_resnet.1} parent=43 // pred_check_branch
          %486 = sbr.rel (%p484) target = $region52
        $region51: #{masked_stochastic_resnet.1} parent=43 // pred_region
          %v487 = vld [vmem:[#allocation2] sm:$0x1]
          %v488 = vld [vmem:[#allocation2 + $0x1] sm:$0x1]
          %v489 = vmul.f32 %v487, 0.001953125
          %v490 = vmul.f32 %v488, 0.001953125
          %v491 = vmul.f32 %v489, %v489
          %v492 = vsub.f32 %v490, %v491
          %v493 = vld [vmem:[%s4 + $0x1] sm:$0x1]
          %v494 = vadd.f32 %v492, 1e-05
          %v495 = vrsqrt.pop %v494
          %v496 = vmul.f32 %v495, %v494
          %v497 = vmul.f32 %v496, %v495
          %v498 = vmul.f32 0.5, %v497
          %v499 = vsub.f32 1.5, %v498
          %v500 = vmul.f32 %v495, %v499
          %vm501 = vweird.f32 %v494
          %vm502 = vweird.f32 %v495
          %vm503 = vmor %vm501, %vm502
          %v504 = vsel %vm503, %v495, %v500
          %v505 = vmul.f32 %v493, %v504
          %506 = vst.msk [vmem:[#allocation2] sm:$0x1] %vm425, %v505
          %v507 = vld [vmem:[%s4 + $0x2] sm:$0x1]
          %v508 = vmul.f32 %v489, %v505
          %v509 = vsub.f32 %v507, %v508
          %510 = vst.msk [vmem:[#allocation2 + $0x1] sm:$0x1] %vm425, %v509
        $region52: #{masked_stochastic_resnet.1} parent=43 // pred_fallthru
          _
      $region44: #{masked_stochastic_resnet.1} parent=39 // pred_fallthru
        _
      %p511 = scmp.eq.s32.totalorder %s20, 1
      // Predicated region
      $region53: #{masked_stochastic_resnet.1} parent=39 // pred_check
        %p512 = pneg %p511
      $region54: #{masked_stochastic_resnet.1} parent=39 // pred_check_branch
        %514 = sbr.rel (%p512) target = $region56
      $region55: #{masked_stochastic_resnet.1} parent=39 // pred_region
        %v515 = vld [vmem:[%s232] sm:$0xff]
        %v516 = vld [vmem:[%s232 + $0x8] sm:$0xff]
        %v517 = vld [vmem:[%s232 + $0x10] sm:$0xff]
        %v518 = vld [vmem:[%s232 + $0x18] sm:$0xff]
        %v519 = vld [vmem:[%s232 + $0x20] sm:$0xff]
        %v520 = vld [vmem:[%s232 + $0x28] sm:$0xff]
        %v521 = vld [vmem:[%s232 + $0x30] sm:$0xff]
        %v522 = vld [vmem:[%s232 + $0x38] sm:$0xff]
        %v523 = vld [vmem:[%s232 + $0x40] sm:$0xff]
        %v524 = vld [vmem:[%s232 + $0x48] sm:$0xff]
        %v525 = vld [vmem:[%s232 + $0x50] sm:$0xff]
        %v526 = vld [vmem:[%s232 + $0x58] sm:$0xff]
        %v527 = vld [vmem:[%s232 + $0x60] sm:$0xff]
        %v528 = vld [vmem:[%s232 + $0x68] sm:$0xff]
        %v529 = vld [vmem:[%s232 + $0x70] sm:$0xff]
        %v530 = vld [vmem:[%s232 + $0x78] sm:$0xff]
        %v531 = vld [vmem:[%s1] sm:$0xff]
        %v532 = vld [vmem:[%s1 + $0x8] sm:$0xff]
        %v533 = vld [vmem:[%s1 + $0x10] sm:$0xff]
        %v534 = vld [vmem:[%s4] sm:$0x1]
        %v535 = vperm.slane %v534, 0
        %vm536 = vcmask 195584
        %v538 = vsel %vm536, %v515, 0
        %v541 = vsel %vm536, %v516, 0
        %v544 = vsel %vm536, %v517, 0
        %v547 = vsel %vm536, %v518, 0
        %v550 = vsel %vm536, %v519, 0
        %v553 = vsel %vm536, %v520, 0
        %v556 = vsel %vm536, %v521, 0
        %v559 = vsel %vm536, %v522, 0
        %v562 = vsel %vm536, %v523, 0
        %v565 = vsel %vm536, %v524, 0
        %v568 = vsel %vm536, %v525, 0
        %v571 = vsel %vm536, %v526, 0
        %v574 = vsel %vm536, %v527, 0
        %v577 = vsel %vm536, %v528, 0
        %v580 = vsel %vm536, %v529, 0
        %v583 = vsel %vm536, %v530, 0
        %585 = vmatpush.msra.mxu0 0.0
        %586 = vmatpush.msra.mxu0 0.0
        %587 = vmatpush.msra.mxu0 0.0
        %588 = vmatpush.msra.mxu0 0.0
        %589 = vmatpush.msra.mxu0 0.0
        %590 = vmatpush.msra.mxu0 0.0
        %591 = vmatpush.msra.mxu0 0.0
        %592 = vmatpush.msra.mxu0 0.0
        %593 = vmatpush.msra.mxu0 0.0
        %594 = vmatpush.msra.mxu0 0.0
        %595 = vmatpush.msra.mxu0 0.0
        %596 = vmatpush.msra.mxu0 0.0
        %597 = vmatpush.msra.mxu0 0.0
        %598 = vmatpush.msra.mxu0 %v533
        %599 = vmatpush.msra.mxu0 %v532
        %600 = vmatpush.msra.mxu0 %v531
        %601 = vmatmul.f32.gmra.mxu0 %v538
        %v602 = vpop.f32.mrf.mxu0
        %v603 = vadd.f32 %v535, %v602
        %604 = vmatmul.f32.gmra.mxu0 %v541
        %v605 = vpop.f32.mrf.mxu0
        %v606 = vadd.f32 %v535, %v605
        %607 = vmatmul.f32.gmra.mxu0 %v544
        %v608 = vpop.f32.mrf.mxu0
        %v609 = vadd.f32 %v535, %v608
        %610 = vmatmul.f32.gmra.mxu0 %v547
        %v611 = vpop.f32.mrf.mxu0
        %v612 = vadd.f32 %v535, %v611
        %613 = vmatmul.f32.gmra.mxu0 %v550
        %v614 = vpop.f32.mrf.mxu0
        %v615 = vadd.f32 %v535, %v614
        %616 = vmatmul.f32.gmra.mxu0 %v553
        %v617 = vpop.f32.mrf.mxu0
        %v618 = vadd.f32 %v535, %v617
        %619 = vmatmul.f32.gmra.mxu0 %v556
        %v620 = vpop.f32.mrf.mxu0
        %v621 = vadd.f32 %v535, %v620
        %622 = vmatmul.f32.gmra.mxu0 %v559
        %v623 = vpop.f32.mrf.mxu0
        %v624 = vadd.f32 %v535, %v623
        %625 = vmatmul.f32.gmra.mxu0 %v562
        %v626 = vpop.f32.mrf.mxu0
        %v627 = vadd.f32 %v535, %v626
        %628 = vmatmul.f32.gmra.mxu0 %v565
        %v629 = vpop.f32.mrf.mxu0
        %v630 = vadd.f32 %v535, %v629
        %631 = vmatmul.f32.gmra.mxu0 %v568
        %v632 = vpop.f32.mrf.mxu0
        %v633 = vadd.f32 %v535, %v632
        %634 = vmatmul.f32.gmra.mxu0 %v571
        %v635 = vpop.f32.mrf.mxu0
        %v636 = vadd.f32 %v535, %v635
        %637 = vmatmul.f32.gmra.mxu0 %v574
        %v638 = vpop.f32.mrf.mxu0
        %v639 = vadd.f32 %v535, %v638
        %640 = vmatmul.f32.gmra.mxu0 %v577
        %v641 = vpop.f32.mrf.mxu0
        %v642 = vadd.f32 %v535, %v641
        %643 = vmatmul.f32.gmra.mxu0 %v580
        %v644 = vpop.f32.mrf.mxu0
        %v645 = vadd.f32 %v535, %v644
        %646 = vmatmul.f32.gmra.mxu0 %v583
        %v647 = vpop.f32.mrf.mxu0
        %v648 = vadd.f32 %v535, %v647
        %649 = vdwg.mxu0
        %v650 = vld [vmem:[#allocation2] sm:$0x1]
        %v651 = vperm.slane %v650, 0
        %v652 = vmul.f32 %v603, %v651
        %v653 = vmul.f32 %v606, %v651
        %v654 = vmul.f32 %v609, %v651
        %v655 = vmul.f32 %v612, %v651
        %v656 = vmul.f32 %v615, %v651
        %v657 = vmul.f32 %v618, %v651
        %v658 = vmul.f32 %v621, %v651
        %v659 = vmul.f32 %v624, %v651
        %v660 = vmul.f32 %v627, %v651
        %v661 = vmul.f32 %v630, %v651
        %v662 = vmul.f32 %v633, %v651
        %v663 = vmul.f32 %v636, %v651
        %v664 = vmul.f32 %v639, %v651
        %v665 = vmul.f32 %v642, %v651
        %v666 = vmul.f32 %v645, %v651
        %v667 = vmul.f32 %v648, %v651
        %v668 = vld [vmem:[#allocation2 + $0x1] sm:$0x1]
        %v669 = vperm.slane %v668, 0
        %v670 = vadd.f32 %v652, %v669
        %v671 = vadd.f32 %v653, %v669
        %v672 = vadd.f32 %v654, %v669
        %v673 = vadd.f32 %v655, %v669
        %v674 = vadd.f32 %v656, %v669
        %v675 = vadd.f32 %v657, %v669
        %v676 = vadd.f32 %v658, %v669
        %v677 = vadd.f32 %v659, %v669
        %v678 = vadd.f32 %v660, %v669
        %v679 = vadd.f32 %v661, %v669
        %v680 = vadd.f32 %v662, %v669
        %v681 = vadd.f32 %v663, %v669
        %v682 = vadd.f32 %v664, %v669
        %v683 = vadd.f32 %v665, %v669
        %v684 = vadd.f32 %v666, %v669
        %v685 = vadd.f32 %v667, %v669
        %v686 = vmax.f32 %v670, 0.0
        %v687 = vmax.f32 %v671, 0.0
        %v688 = vmax.f32 %v672, 0.0
        %v689 = vmax.f32 %v673, 0.0
        %v690 = vmax.f32 %v674, 0.0
        %v691 = vmax.f32 %v675, 0.0
        %v692 = vmax.f32 %v676, 0.0
        %v693 = vmax.f32 %v677, 0.0
        %v694 = vmax.f32 %v678, 0.0
        %v695 = vmax.f32 %v679, 0.0
        %v696 = vmax.f32 %v680, 0.0
        %v697 = vmax.f32 %v681, 0.0
        %v698 = vmax.f32 %v682, 0.0
        %v699 = vmax.f32 %v683, 0.0
        %v700 = vmax.f32 %v684, 0.0
        %v701 = vmax.f32 %v685, 0.0
        %v702 = vld [vmem:[%s2] sm:$0xff]
        %v703 = vld [vmem:[%s2 + $0x8] sm:$0xff]
        %v704 = vld [vmem:[%s2 + $0x10] sm:$0xff]
        %v705 = vld [vmem:[%s2 + $0x18] sm:$0xff]
        %v706 = vld [vmem:[%s4 + $0x3] sm:$0x1]
        %v707 = vperm.slane %v706, 0
        %vm708 = vcmask 261120
        %v710 = vsel %vm708, %v686, 0
        %v713 = vsel %vm708, %v687, 0
        %v716 = vsel %vm708, %v688, 0
        %v719 = vsel %vm708, %v689, 0
        %v722 = vsel %vm708, %v690, 0
        %v725 = vsel %vm708, %v691, 0
        %v728 = vsel %vm708, %v692, 0
        %v731 = vsel %vm708, %v693, 0
        %v734 = vsel %vm708, %v694, 0
        %v737 = vsel %vm708, %v695, 0
        %v740 = vsel %vm708, %v696, 0
        %v743 = vsel %vm708, %v697, 0
        %v746 = vsel %vm708, %v698, 0
        %v749 = vsel %vm708, %v699, 0
        %v752 = vsel %vm708, %v700, 0
        %v755 = vsel %vm708, %v701, 0
        %757 = vmatpush.msra.mxu0 0.0
        %758 = vmatpush.msra.mxu0 0.0
        %759 = vmatpush.msra.mxu0 0.0
        %760 = vmatpush.msra.mxu0 0.0
        %761 = vmatpush.msra.mxu0 0.0
        %762 = vmatpush.msra.mxu0 0.0
        %763 = vmatpush.msra.mxu0 0.0
        %764 = vmatpush.msra.mxu0 0.0
        %765 = vmatpush.msra.mxu0 0.0
        %766 = vmatpush.msra.mxu0 0.0
        %767 = vmatpush.msra.mxu0 0.0
        %768 = vmatpush.msra.mxu0 0.0
        %769 = vmatpush.msra.mxu0 %v705
        %770 = vmatpush.msra.mxu0 %v704
        %771 = vmatpush.msra.mxu0 %v703
        %772 = vmatpush.msra.mxu0 %v702
        %773 = vmatmul.f32.gmra.mxu0 %v710
        %v774 = vpop.f32.mrf.mxu0
        %v775 = vadd.f32 %v707, %v774
        %776 = vmatmul.f32.gmra.mxu0 %v713
        %v777 = vpop.f32.mrf.mxu0
        %v778 = vadd.f32 %v707, %v777
        %779 = vmatmul.f32.gmra.mxu0 %v716
        %v780 = vpop.f32.mrf.mxu0
        %v781 = vadd.f32 %v707, %v780
        %782 = vmatmul.f32.gmra.mxu0 %v719
        %v783 = vpop.f32.mrf.mxu0
        %v784 = vadd.f32 %v707, %v783
        %785 = vmatmul.f32.gmra.mxu0 %v722
        %v786 = vpop.f32.mrf.mxu0
        %v787 = vadd.f32 %v707, %v786
        %788 = vmatmul.f32.gmra.mxu0 %v725
        %v789 = vpop.f32.mrf.mxu0
        %v790 = vadd.f32 %v707, %v789
        %791 = vmatmul.f32.gmra.mxu0 %v728
        %v792 = vpop.f32.mrf.mxu0
        %v793 = vadd.f32 %v707, %v792
        %794 = vmatmul.f32.gmra.mxu0 %v731
        %v795 = vpop.f32.mrf.mxu0
        %v796 = vadd.f32 %v707, %v795
        %797 = vmatmul.f32.gmra.mxu0 %v734
        %v798 = vpop.f32.mrf.mxu0
        %v799 = vadd.f32 %v707, %v798
        %800 = vmatmul.f32.gmra.mxu0 %v737
        %v801 = vpop.f32.mrf.mxu0
        %v802 = vadd.f32 %v707, %v801
        %803 = vmatmul.f32.gmra.mxu0 %v740
        %v804 = vpop.f32.mrf.mxu0
        %v805 = vadd.f32 %v707, %v804
        %806 = vmatmul.f32.gmra.mxu0 %v743
        %v807 = vpop.f32.mrf.mxu0
        %v808 = vadd.f32 %v707, %v807
        %809 = vmatmul.f32.gmra.mxu0 %v746
        %v810 = vpop.f32.mrf.mxu0
        %v811 = vadd.f32 %v707, %v810
        %812 = vmatmul.f32.gmra.mxu0 %v749
        %v813 = vpop.f32.mrf.mxu0
        %v814 = vadd.f32 %v707, %v813
        %815 = vmatmul.f32.gmra.mxu0 %v752
        %v816 = vpop.f32.mrf.mxu0
        %v817 = vadd.f32 %v707, %v816
        %818 = vmatmul.f32.gmra.mxu0 %v755
        %v819 = vpop.f32.mrf.mxu0
        %v820 = vadd.f32 %v707, %v819
        %821 = vdwg.mxu0
        %v822 = vadd.f32 %v775, %v603
        %v823 = vadd.f32 %v778, %v606
        %v824 = vadd.f32 %v781, %v609
        %v825 = vadd.f32 %v784, %v612
        %v826 = vadd.f32 %v787, %v615
        %v827 = vadd.f32 %v790, %v618
        %v828 = vadd.f32 %v793, %v621
        %v829 = vadd.f32 %v796, %v624
        %v830 = vadd.f32 %v799, %v627
        %v831 = vadd.f32 %v802, %v630
        %v832 = vadd.f32 %v805, %v633
        %v833 = vadd.f32 %v808, %v636
        %v834 = vadd.f32 %v811, %v639
        %v835 = vadd.f32 %v814, %v642
        %v836 = vadd.f32 %v817, %v645
        %v837 = vadd.f32 %v820, %v648
        %v838 = vld [vmem:[%s3] sm:$0xff]
        %v839 = vld [vmem:[%s3 + $0x8] sm:$0xff]
        %v840 = vld [vmem:[%s3 + $0x10] sm:$0xff]
        %v841 = vld [vmem:[%s3 + $0x18] sm:$0xff]
        %v842 = vld [vmem:[%s4 + $0x4] sm:$0x1]
        %v843 = vperm.slane %v842, 0
        %v845 = vsel %vm708, %v822, 0
        %v848 = vsel %vm708, %v823, 0
        %v851 = vsel %vm708, %v824, 0
        %v854 = vsel %vm708, %v825, 0
        %v857 = vsel %vm708, %v826, 0
        %v860 = vsel %vm708, %v827, 0
        %v863 = vsel %vm708, %v828, 0
        %v866 = vsel %vm708, %v829, 0
        %v869 = vsel %vm708, %v830, 0
        %v872 = vsel %vm708, %v831, 0
        %v875 = vsel %vm708, %v832, 0
        %v878 = vsel %vm708, %v833, 0
        %v881 = vsel %vm708, %v834, 0
        %v884 = vsel %vm708, %v835, 0
        %v887 = vsel %vm708, %v836, 0
        %v890 = vsel %vm708, %v837, 0
        %892 = vmatpush.msra.mxu0 0.0
        %893 = vmatpush.msra.mxu0 0.0
        %894 = vmatpush.msra.mxu0 0.0
        %895 = vmatpush.msra.mxu0 0.0
        %896 = vmatpush.msra.mxu0 0.0
        %897 = vmatpush.msra.mxu0 0.0
        %898 = vmatpush.msra.mxu0 0.0
        %899 = vmatpush.msra.mxu0 0.0
        %900 = vmatpush.msra.mxu0 0.0
        %901 = vmatpush.msra.mxu0 0.0
        %902 = vmatpush.msra.mxu0 0.0
        %903 = vmatpush.msra.mxu0 0.0
        %904 = vmatpush.msra.mxu0 %v841
        %905 = vmatpush.msra.mxu0 %v840
        %906 = vmatpush.msra.mxu0 %v839
        %907 = vmatpush.msra.mxu0 %v838
        %908 = vmatmul.f32.gmra.mxu0 %v845
        %v909 = vpop.f32.mrf.mxu0
        %v910 = vadd.f32 %v843, %v909
        %911 = vmatmul.f32.gmra.mxu0 %v848
        %v912 = vpop.f32.mrf.mxu0
        %v913 = vadd.f32 %v843, %v912
        %914 = vmatmul.f32.gmra.mxu0 %v851
        %v915 = vpop.f32.mrf.mxu0
        %v916 = vadd.f32 %v843, %v915
        %917 = vmatmul.f32.gmra.mxu0 %v854
        %v918 = vpop.f32.mrf.mxu0
        %v919 = vadd.f32 %v843, %v918
        %920 = vmatmul.f32.gmra.mxu0 %v857
        %v921 = vpop.f32.mrf.mxu0
        %v922 = vadd.f32 %v843, %v921
        %923 = vmatmul.f32.gmra.mxu0 %v860
        %v924 = vpop.f32.mrf.mxu0
        %v925 = vadd.f32 %v843, %v924
        %926 = vmatmul.f32.gmra.mxu0 %v863
        %v927 = vpop.f32.mrf.mxu0
        %v928 = vadd.f32 %v843, %v927
        %929 = vmatmul.f32.gmra.mxu0 %v866
        %v930 = vpop.f32.mrf.mxu0
        %v931 = vadd.f32 %v843, %v930
        %932 = vmatmul.f32.gmra.mxu0 %v869
        %v933 = vpop.f32.mrf.mxu0
        %v934 = vadd.f32 %v843, %v933
        %935 = vmatmul.f32.gmra.mxu0 %v872
        %v936 = vpop.f32.mrf.mxu0
        %v937 = vadd.f32 %v843, %v936
        %938 = vmatmul.f32.gmra.mxu0 %v875
        %v939 = vpop.f32.mrf.mxu0
        %v940 = vadd.f32 %v843, %v939
        %941 = vmatmul.f32.gmra.mxu0 %v878
        %v942 = vpop.f32.mrf.mxu0
        %v943 = vadd.f32 %v843, %v942
        %944 = vmatmul.f32.gmra.mxu0 %v881
        %v945 = vpop.f32.mrf.mxu0
        %v946 = vadd.f32 %v843, %v945
        %947 = vmatmul.f32.gmra.mxu0 %v884
        %v948 = vpop.f32.mrf.mxu0
        %v949 = vadd.f32 %v843, %v948
        %950 = vmatmul.f32.gmra.mxu0 %v887
        %v951 = vpop.f32.mrf.mxu0
        %v952 = vadd.f32 %v843, %v951
        %953 = vmatmul.f32.gmra.mxu0 %v890
        %v954 = vpop.f32.mrf.mxu0
        %v955 = vadd.f32 %v843, %v954
        %956 = vdwg.mxu0
        %957 = vst.msk [vmem:[%s238] sm:$0xff] %vm708, %v910
        %958 = vst.msk [vmem:[%s238 + $0x8] sm:$0xff] %vm708, %v913
        %959 = vst.msk [vmem:[%s238 + $0x10] sm:$0xff] %vm708, %v916
        %960 = vst.msk [vmem:[%s238 + $0x18] sm:$0xff] %vm708, %v919
        %961 = vst.msk [vmem:[%s238 + $0x20] sm:$0xff] %vm708, %v922
        %962 = vst.msk [vmem:[%s238 + $0x28] sm:$0xff] %vm708, %v925
        %963 = vst.msk [vmem:[%s238 + $0x30] sm:$0xff] %vm708, %v928
        %964 = vst.msk [vmem:[%s238 + $0x38] sm:$0xff] %vm708, %v931
        %965 = vst.msk [vmem:[%s238 + $0x40] sm:$0xff] %vm708, %v934
        %966 = vst.msk [vmem:[%s238 + $0x48] sm:$0xff] %vm708, %v937
        %967 = vst.msk [vmem:[%s238 + $0x50] sm:$0xff] %vm708, %v940
        %968 = vst.msk [vmem:[%s238 + $0x58] sm:$0xff] %vm708, %v943
        %969 = vst.msk [vmem:[%s238 + $0x60] sm:$0xff] %vm708, %v946
        %970 = vst.msk [vmem:[%s238 + $0x68] sm:$0xff] %vm708, %v949
        %971 = vst.msk [vmem:[%s238 + $0x70] sm:$0xff] %vm708, %v952
        %972 = vst.msk [vmem:[%s238 + $0x78] sm:$0xff] %vm708, %v955
      $region56: #{masked_stochastic_resnet.1} parent=39 // pred_fallthru
        _
      %s973 = smul.u32 16, %s21
      %p974 = scmp.lt.s32.totalorder %s973, 63
      %s975 = scalar_select %p974, %s973, 63
      %s976 = smul.addr %s975, 8
      %s977 = scalar_lea.vmem %s5, %s976
      // Predicated region
      $region57: #{masked_stochastic_resnet.1} parent=39 // pred_check
        %p978 = pneg %p156
      $region58: #{masked_stochastic_resnet.1} parent=39 // pred_check_branch
        %980 = sbr.rel (%p978) target = $region60
      $region59: #{masked_stochastic_resnet.1} parent=39 // pred_region
        %s981 = smul.u32 16, %s21
      $region60: #{masked_stochastic_resnet.1} parent=39 // pred_fallthru
        _
    $region40: #{masked_stochastic_resnet.1} parent=5 // pred_fallthru
      _
    %p982 = scmp.le.s32.totalorder 2, %s11
    // Predicated region
    $region61: #{masked_stochastic_resnet.1} parent=5 // pred_check
      %p983 = pneg %p982
    $region62: #{masked_stochastic_resnet.1} parent=5 // pred_check_branch
      %985 = sbr.rel (%p983) target = $region64
    $region63: #{masked_stochastic_resnet.1} parent=5 // pred_region
      %s986 = ssub.s32 %s11, 2
      // Predicated region
      $region65: #{masked_stochastic_resnet.1} parent=63 // pred_check
        %p987 = pneg %p162
      $region66: #{masked_stochastic_resnet.1} parent=63 // pred_check_branch
        %989 = sbr.rel (%p987) target = $region68
      $region67: #{masked_stochastic_resnet.1} parent=63 // pred_region
        %s990 = smul.u32 16, %s23
        %p991 = scmp.lt.s32.totalorder %s990, 63
        %s992 = scalar_select %p991, %s990, 63
        %s993 = smul.addr %s992, 8
        %s994 = scalar_lea.vmem %s5, %s993
      $region68: #{masked_stochastic_resnet.1} parent=63 // pred_fallthru
        _
    $region64: #{masked_stochastic_resnet.1} parent=5 // pred_fallthru
      _
  $region6: #{masked_stochastic_resnet.1} parent=0 // loop_footer
    %s15 = sadd.s32 1, %s11
  $region7: #{masked_stochastic_resnet.1} parent=0 // loop_footer_branch
    %10 = sbr.rel target = $region3
  $region8: #{masked_stochastic_resnet.1} parent=0 // loop_exit
    _

</llo_original>
